<compile_context>
chip_gen: v7x
topology: tpu7x:2x2x1
jax: 0.10.0
libtpu: 0.0.40
codegen_flags: <defaults>
</compile_context>

<pallas_src>
import functools

import jax
import jax.numpy as jnp
from jax.experimental import pallas as pl
from jax.experimental.pallas import tpu as pltpu

# ----------------------------- model sizes ---------------------------------
INPUT_SIZE = 100        # decoder input vocab
EMB_SIZE = 16           # embedding_size
HIDDEN = 32             # hidden_size (4*H = 128 -> lane friendly)
OUTPUT_SIZE = 128       # len(english.vocab) stand-in
NUM_LAYERS = 2
BATCH = 8
DROPOUT_P = 0.5         # identity in eval/inference mode
VOCAB_PAD = ((INPUT_SIZE + 127) // 128) * 128   # lane-aligned one-hot width (=128)
T_CHUNK_MAX = 16        # decode steps per grid iteration (unrolled in-kernel)


def decoder_kernel(chunk_steps,
                   n_ref, tok_ref, g0_ref, state0_ref,
                   whh0_ref, wih1_ref, whh1_ref, b1_ref, wfc_ref, bfc_ref,
                   pred_ref, state_ref, x0_scr, h1_scr):
    """Runs `chunk_steps` fused decode steps per grid iteration."""
    H = HIDDEN
    CB = chunk_steps * BATCH
    chunk = pl.program_id(0)

    # Initialize the resident packed-state block from the input on chunk 0.
    @pl.when(chunk == 0)
    def _():
        state_ref[...] = state0_ref[...]

    # --- prologue: batched input projection for the whole chunk -------------
    # onehot @ (emb_table @ W_ih0 + b0)  ==  emb @ W_ih0 + b0   (b0 folded in)
    tok = tok_ref[...]                                        # (CB, 1) int32
    vocab_iota = jax.lax.broadcasted_iota(jnp.int32, (CB, VOCAB_PAD), 1)
    onehot = (vocab_iota == tok).astype(jnp.float32)          # (CB, 128)
    x0_scr[...] = jnp.dot(onehot, g0_ref[...],
                          preferred_element_type=jnp.float32)  # (CB, 4H)
    # dropout on the embedding: identity (eval mode)

    # --- hoisted constants (kept out of the unrolled step loop) -------------
    whh0 = whh0_ref[...]
    wih1 = wih1_ref[...]
    whh1 = whh1_ref[...]
    b1b = jnp.broadcast_to(b1_ref[...], (BATCH, 4 * H))
    n_steps = n_ref[0]
    base = chunk * chunk_steps

    # unpack packed resident state once per chunk: [h0 | h1 | c0 | c1]
    state = state_ref[...]
    h0 = state[:, 0 * H:1 * H]
    h1 = state[:, 1 * H:2 * H]
    c0 = state[:, 2 * H:3 * H]
    c1 = state[:, 3 * H:4 * H]

    def cell_update(gates, c):
        # one full-vreg sigmoid pass; tanh only on the 32-lane g slice
        sig = jax.nn.sigmoid(gates)
        i = sig[:, 0 * H:1 * H]
        f = sig[:, 1 * H:2 * H]
        o = sig[:, 3 * H:4 * H]
        g = jnp.tanh(gates[:, 2 * H:3 * H])
        c_new = f * c + i * g
        h_new = o * jnp.tanh(c_new)
        return h_new, c_new

    def step(i, carry):
        h0, h1, c0, c1 = carry
        row = pl.multiple_of(i * BATCH, BATCH)
        x0s = x0_scr[pl.ds(row, BATCH), :]                    # (B, 4H)

        # layer 0: input term precomputed; only the recurrent dot is serial
        gates0 = x0s + jnp.dot(h0, whh0, preferred_element_type=jnp.float32)
        h0n, c0n = cell_update(gates0, c0)

        # inter-layer dropout: identity (eval mode)
        # layer 1: two small dots (no lane concat on the serial chain)
        gates1 = (jnp.dot(h1, whh1, preferred_element_type=jnp.float32)
                  + jnp.dot(h0n, wih1, preferred_element_type=jnp.float32)
                  + b1b)
        h1n, c1n = cell_update(gates1, c1)

        # defer the fc head: stash h1 for this step (epilogue matmul)
        h1_scr[pl.ds(row, BATCH), :] = h1n

        # mask out padded steps (only present in the last chunk)
        valid = (base + i) < n_steps
        h0 = jnp.where(valid, h0n, h0)
        h1 = jnp.where(valid, h1n, h1)
        c0 = jnp.where(valid, c0n, c0)
        c1 = jnp.where(valid, c1n, c1)
        return h0, h1, c0, c1

    h0, h1, c0, c1 = jax.lax.fori_loop(0, chunk_steps, step,
                                       (h0, h1, c0, c1), unroll=True)

    # --- epilogue: chunk-batched fc head + single lane-dense writebacks -----
    logits = (jnp.dot(h1_scr[...], wfc_ref[...],
                      preferred_element_type=jnp.float32)
              + bfc_ref[...])                                  # (CB, V)
    pred_ref[...] = logits.reshape(chunk_steps, BATCH, OUTPUT_SIZE)

    # repack state once per chunk (single (8,128) lane-dense store)
    state_ref[...] = jnp.concatenate([h0, h1, c0, c1], axis=-1)


def _resident(shape):
    """Whole-array block, constant index_map -> stays in VMEM across the grid."""
    nd = len(shape)
    return pl.BlockSpec(shape, lambda *_: (0,) * nd)


def decoder_decode_fused(tokens, hidden, cell, kparams):
    """Run T decoder steps in ONE pallas_call (chunked time grid).

    tokens: (T, B) int32; hidden/cell: (NUM_LAYERS, B, HIDDEN) f32.
    Returns (pred_seq (T,B,V), hidden_out, cell_out).
    """
    T = int(tokens.shape[0])
    chunk = min(T, T_CHUNK_MAX)
    n_chunks = -(-T // chunk)
    T_pad = n_chunks * chunk
    CB = chunk * BATCH

    tok_pad = jnp.zeros((T_pad, BATCH), jnp.int32).at[:T].set(tokens.astype(jnp.int32))
    tok2 = tok_pad.reshape(T_pad * BATCH, 1)
    n_steps = jnp.array([T], jnp.int32)
    state_in = jnp.concatenate([hidden[0], hidden[1], cell[0], cell[1]], axis=-1)

    grid_spec = pltpu.PrefetchScalarGridSpec(
        num_scalar_prefetch=0,
        grid=(n_chunks,),
        in_specs=[
            pl.BlockSpec(memory_space=pltpu.MemorySpace.SMEM),           # n_steps
            pl.BlockSpec((CB, 1), lambda c: (c, 0)),                     # tokens (per chunk)
            _resident((VOCAB_PAD, 4 * HIDDEN)),                          # G0 = table@Wih0 + b0
            _resident((BATCH, 4 * HIDDEN)),                              # packed initial state
            _resident((HIDDEN, 4 * HIDDEN)),                             # W_hh0
            _resident((HIDDEN, 4 * HIDDEN)),                             # W_ih1
            _resident((HIDDEN, 4 * HIDDEN)),                             # W_hh1
            _resident((1, 4 * HIDDEN)),                                  # b1
            _resident((HIDDEN, OUTPUT_SIZE)),                            # W_fc (pre-transposed)
            _resident((1, OUTPUT_SIZE)),                                 # b_fc
        ],
        out_specs=(
            pl.BlockSpec((chunk, BATCH, OUTPUT_SIZE), lambda c: (c, 0, 0)),  # chunk logits
            _resident((BATCH, 4 * HIDDEN)),                                  # final packed state
        ),
        scratch_shapes=[
            pltpu.VMEM((CB, 4 * HIDDEN), jnp.float32),   # X0 (input proj + b0) per chunk
            pltpu.VMEM((CB, HIDDEN), jnp.float32),       # h1 per step, per chunk
        ],
    )

    pred_pad, state_out = pl.pallas_call(
        functools.partial(decoder_kernel, chunk),
        out_shape=(
            jax.ShapeDtypeStruct((T_pad, BATCH, OUTPUT_SIZE), jnp.float32),
            jax.ShapeDtypeStruct((BATCH, 4 * HIDDEN), jnp.float32),
        ),
        grid_spec=grid_spec,
        input_output_aliases={3: 1},   # packed state in -> packed state out
        compiler_params=pltpu.CompilerParams(
            # time axis is a carried recurrence -> sequential.
            # (On v7x, a leading parallel batch/beam-tile axis would engage both
            #  TCs once independent work exists; B=8 fits one tile here.)
            dimension_semantics=("arbitrary",)),
    )(n_steps, tok2, kparams["g0"], state_in,
      kparams["whh0"], kparams["wih1"], kparams["whh1"], kparams["b1"],
      kparams["wfc"], kparams["bfc"])

    H = HIDDEN
    hidden_out = jnp.stack([state_out[:, 0 * H:1 * H], state_out[:, 1 * H:2 * H]])
    cell_out = jnp.stack([state_out[:, 2 * H:3 * H], state_out[:, 3 * H:4 * H]])
    return pred_pad[:T], hidden_out, cell_out


def decoder_forward(x_tokens, hidden, cell, kparams):
    """Single decoder step — exactly the PyTorch Decoder.forward semantics."""
    pred_seq, h_out, c_out = decoder_decode_fused(x_tokens[None, :], hidden, cell, kparams)
    return pred_seq[0], h_out, c_out


def init_params(key):
    ks = jax.random.split(key, 12)
    s = 1.0 / jnp.sqrt(HIDDEN)

    def unif(k, shape):
        return jax.random.uniform(k, shape, jnp.float32, -s, s)

    # Weights stored pre-transposed ((in, 4H) / (H, V)) so kernels do x @ W,
    # with [W_ih; W_hh] pre-concatenated and bias pairs (b_ih + b_hh) pre-summed.
    wih0 = unif(ks[1], (EMB_SIZE, 4 * HIDDEN))
    whh0 = unif(ks[2], (HIDDEN, 4 * HIDDEN))
    wih1 = unif(ks[5], (HIDDEN, 4 * HIDDEN))
    whh1 = unif(ks[6], (HIDDEN, 4 * HIDDEN))

    table = jax.random.normal(ks[0], (INPUT_SIZE, EMB_SIZE), jnp.float32)
    table_pad = jnp.zeros((VOCAB_PAD, EMB_SIZE), jnp.float32).at[:INPUT_SIZE].set(table)

    return {
        "emb_table": table_pad,   # zero-padded rows >= INPUT_SIZE are never hit
        "w0": jnp.concatenate([wih0, whh0], axis=0),
        "b0": unif(ks[3], (1, 4 * HIDDEN)) + unif(ks[4], (1, 4 * HIDDEN)),
        "w1": jnp.concatenate([wih1, whh1], axis=0),
        "b1": unif(ks[7], (1, 4 * HIDDEN)) + unif(ks[8], (1, 4 * HIDDEN)),
        "wfc": unif(ks[9], (HIDDEN, OUTPUT_SIZE)),
        "bfc": unif(ks[10], (1, OUTPUT_SIZE)),
    }


def prepare_kernel_params(params):
    """Kernel-layout params: embedding folded into layer-0 input projection."""
    wih0 = params["w0"][:EMB_SIZE]
    whh0 = params["w0"][EMB_SIZE:]
    g0 = params["emb_table"] @ wih0 + params["b0"]   # (VOCAB_PAD, 4H), b0 folded
    return {
        "g0": g0,
        "whh0": whh0,
        "wih1": params["w1"][:HIDDEN],
        "whh1": params["w1"][HIDDEN:],
        "b1": params["b1"],
        "wfc": params["wfc"],
        "bfc": params["bfc"],
    }


def decoder_reference_step(tok, hidden, cell, params):
    """Pure-JAX reference of one decoder step (same math, gather embedding)."""
    emb = params["emb_table"][tok]          # (B, E)
    H = HIDDEN

    def cell_fn(x, h, c, w, b):
        d_in = x.shape[-1]
        wih, whh = w[:d_in], w[d_in:]
        g = x @ wih + h @ whh + b
        i = jax.nn.sigmoid(g[:, :H])
        f = jax.nn.sigmoid(g[:, H:2 * H])
        gg = jnp.tanh(g[:, 2 * H:3 * H])
        o = jax.nn.sigmoid(g[:, 3 * H:])
        c_new = f * c + i * gg
        return o * jnp.tanh(c_new), c_new

    h0, c0 = cell_fn(emb, hidden[0], cell[0], params["w0"], params["b0"])
    h1, c1 = cell_fn(h0, hidden[1], cell[1], params["w1"], params["b1"])
    pred = h1 @ params["wfc"] + params["bfc"]
    return pred, jnp.stack([h0, h1]), jnp.stack([c0, c1])


if __name__ == "__main__":
    key = jax.random.PRNGKey(0)
    k_param, k_x, k_h, k_c, k_seq = jax.random.split(key, 5)

    params = init_params(k_param)
    kparams = prepare_kernel_params(params)
    hidden = jax.random.normal(k_h, (NUM_LAYERS, BATCH, HIDDEN), jnp.float32)
    cell = jax.random.normal(k_c, (NUM_LAYERS, BATCH, HIDDEN), jnp.float32)

    # --- single decoder step (PyTorch Decoder.forward semantics) -----------
    x = jax.random.randint(k_x, (BATCH,), 0, INPUT_SIZE, dtype=jnp.int32)
    pred, h_out, c_out = decoder_forward(x, hidden, cell, kparams)
    jax.block_until_ready((pred, h_out, c_out))

    pred_r, h_r, c_r = decoder_reference_step(x, hidden, cell, params)
    assert jnp.allclose(pred, pred_r, atol=1e-4, rtol=1e-4)
    assert jnp.allclose(h_out, h_r, atol=1e-4, rtol=1e-4)
    assert jnp.allclose(c_out, c_r, atol=1e-4, rtol=1e-4)

    # --- fused multi-step decode: T steps in ONE pallas_call ----------------
    T = 8
    toks = jax.random.randint(k_seq, (T, BATCH), 0, INPUT_SIZE, dtype=jnp.int32)
    pred_seq, h_seq, c_seq = decoder_decode_fused(toks, hidden, cell, kparams)
    jax.block_until_ready((pred_seq, h_seq, c_seq))

    h_ref, c_ref = hidden, cell
    preds_ref = []
    for t in range(T):
        p_t, h_ref, c_ref = decoder_reference_step(toks[t], h_ref, c_ref, params)
        preds_ref.append(p_t)
    preds_ref = jnp.stack(preds_ref)
    assert jnp.allclose(pred_seq, preds_ref, atol=1e-3, rtol=1e-3)
    assert jnp.allclose(h_seq, h_ref, atol=1e-3, rtol=1e-3)
    assert jnp.allclose(c_seq, c_ref, atol=1e-3, rtol=1e-3)

    print("KERNEL_OK")
</pallas_src>

<mosaic_0001>
module attributes {stable_mosaic.version = 11 : i64} {
  func.func @decoder_kernel(%arg0: i32, %arg1: memref<1xi32, #tpu.memory_space<smem>>, %arg2: memref<8x1xi32, #tpu.memory_space<vmem>>, %arg3: memref<128x128xf32, #tpu.memory_space<vmem>>, %arg4: memref<8x128xf32, #tpu.memory_space<vmem>>, %arg5: memref<32x128xf32, #tpu.memory_space<vmem>>, %arg6: memref<32x128xf32, #tpu.memory_space<vmem>>, %arg7: memref<32x128xf32, #tpu.memory_space<vmem>>, %arg8: memref<1x128xf32, #tpu.memory_space<vmem>>, %arg9: memref<32x128xf32, #tpu.memory_space<vmem>>, %arg10: memref<1x128xf32, #tpu.memory_space<vmem>>, %arg11: memref<1x8x128xf32, #tpu.memory_space<vmem>>, %arg12: memref<8x128xf32, #tpu.memory_space<vmem>>, %arg13: memref<8x128xf32, #tpu.memory_space<vmem>>, %arg14: memref<8x32xf32, #tpu.memory_space<vmem>>) attributes {dimension_semantics = [#tpu.dimension_semantics<arbitrary>], iteration_bounds = array<i64: 1>, scalar_prefetch = 0 : i64, scratch_operands = 2 : i64, tpu.core_type = #tpu.core_type<tc>, window_params = [{transform_indices = @transform_0, window_bounds = array<i64: 1>}, {transform_indices = @transform_1, window_bounds = array<i64: 8, 1>}, {pipeline_mode = #tpu.pipeline_mode<synchronous>, transform_indices = @transform_2, window_bounds = array<i64: 128, 128>}, {pipeline_mode = #tpu.pipeline_mode<synchronous>, transform_indices = @transform_3, window_bounds = array<i64: 8, 128>}, {pipeline_mode = #tpu.pipeline_mode<synchronous>, transform_indices = @transform_4, window_bounds = array<i64: 32, 128>}, {pipeline_mode = #tpu.pipeline_mode<synchronous>, transform_indices = @transform_5, window_bounds = array<i64: 32, 128>}, {pipeline_mode = #tpu.pipeline_mode<synchronous>, transform_indices = @transform_6, window_bounds = array<i64: 32, 128>}, {pipeline_mode = #tpu.pipeline_mode<synchronous>, transform_indices = @transform_7, window_bounds = array<i64: 1, 128>}, {pipeline_mode = #tpu.pipeline_mode<synchronous>, transform_indices = @transform_8, window_bounds = array<i64: 32, 128>}, {pipeline_mode = #tpu.pipeline_mode<synchronous>, transform_indices = @transform_9, window_bounds = array<i64: 1, 128>}, {transform_indices = @transform_10, window_bounds = array<i64: 1, 8, 128>}, {pipeline_mode = #tpu.pipeline_mode<synchronous>, transform_indices = @transform_11, window_bounds = array<i64: 8, 128>}]} {
    %c0_i32 = arith.constant 0 : i32
    %0 = arith.cmpi eq, %arg0, %c0_i32 : i32
    %1 = arith.extui %0 : i1 to i32
    %c0_i32_0 = arith.constant 0 : i32
    %2 = arith.cmpi ne, %1, %c0_i32_0 : i32
    scf.if %2 {
      %c0_38 = arith.constant 0 : index
      %c0_39 = arith.constant 0 : index
      %83 = vector.load %arg4[%c0_38, %c0_39] : memref<8x128xf32, #tpu.memory_space<vmem>>, vector<8x128xf32>
      %c0_40 = arith.constant 0 : index
      %c0_41 = arith.constant 0 : index
      %84 = vector.load %arg12[%c0_40, %c0_41] : memref<8x128xf32, #tpu.memory_space<vmem>>, vector<8x128xf32>
      tpu.vector_store %arg12[%c0_40, %c0_41], %83 {strides = array<i32>} : memref<8x128xf32, #tpu.memory_space<vmem>>, vector<8x128xf32>,
    } else {
    }
    %c0 = arith.constant 0 : index
    %c0_1 = arith.constant 0 : index
    %3 = vector.load %arg2[%c0, %c0_1] : memref<8x1xi32, #tpu.memory_space<vmem>>, vector<8x1xi32>
    %4 = tpu.iota {dimensions = array<i32: 1>} : vector<8x128xi32>
    %5 = vector.broadcast %3 : vector<8x1xi32> to vector<8x128xi32>
    %6 = arith.cmpi eq, %4, %5 : vector<8x128xi32>
    %7 = arith.extui %6 : vector<8x128xi1> to vector<8x128xi32>
    %8 = arith.sitofp %7 : vector<8x128xi32> to vector<8x128xf32>
    %c0_2 = arith.constant 0 : index
    %c0_3 = arith.constant 0 : index
    %9 = vector.load %arg3[%c0_2, %c0_3] : memref<128x128xf32, #tpu.memory_space<vmem>>, vector<128x128xf32>
    %cst = arith.constant dense<0.000000e+00> : vector<8x128xf32>
    %10 = tpu.matmul %8, %9, %cst {dimension_numbers = #tpu.dot_dimension_numbers<[1], [0], [0], [1], [0, 0, 1, 1], [], []>} : vector<8x128xf32>, vector<128x128xf32>, vector<8x128xf32> -> vector<8x128xf32>
    %c0_4 = arith.constant 0 : index
    %c0_5 = arith.constant 0 : index
    %11 = vector.load %arg13[%c0_4, %c0_5] : memref<8x128xf32, #tpu.memory_space<vmem>>, vector<8x128xf32>
    tpu.vector_store %arg13[%c0_4, %c0_5], %10 {strides = array<i32>} : memref<8x128xf32, #tpu.memory_space<vmem>>, vector<8x128xf32>,
    %c0_6 = arith.constant 0 : index
    %c0_7 = arith.constant 0 : index
    %12 = vector.load %arg5[%c0_6, %c0_7] : memref<32x128xf32, #tpu.memory_space<vmem>>, vector<32x128xf32>
    %c0_8 = arith.constant 0 : index
    %c0_9 = arith.constant 0 : index
    %13 = vector.load %arg6[%c0_8, %c0_9] : memref<32x128xf32, #tpu.memory_space<vmem>>, vector<32x128xf32>
    %c0_10 = arith.constant 0 : index
    %c0_11 = arith.constant 0 : index
    %14 = vector.load %arg7[%c0_10, %c0_11] : memref<32x128xf32, #tpu.memory_space<vmem>>, vector<32x128xf32>
    %c0_12 = arith.constant 0 : index
    %c0_13 = arith.constant 0 : index
    %15 = vector.load %arg8[%c0_12, %c0_13] : memref<1x128xf32, #tpu.memory_space<vmem>>, vector<1x128xf32>
    %16 = vector.shape_cast %15 : vector<1x128xf32> to vector<1x128xf32>
    %17 = vector.broadcast %16 : vector<1x128xf32> to vector<8x128xf32>
    %c0_14 = arith.constant 0 : index
    %18 = memref.load %arg1[%c0_14] : memref<1xi32, #tpu.memory_space<smem>>
    %c1_i32 = arith.constant 1 : i32
    %19 = arith.muli %arg0, %c1_i32 : i32
    %c0_15 = arith.constant 0 : index
    %c0_16 = arith.constant 0 : index
    %20 = vector.load %arg12[%c0_15, %c0_16] : memref<8x128xf32, #tpu.memory_space<vmem>>, vector<8x128xf32>
    %21 = vector.extract_strided_slice %20 {offsets = [0, 0], sizes = [8, 32], strides = [1, 1]} : vector<8x128xf32> to vector<8x32xf32>
    %22 = vector.extract_strided_slice %20 {offsets = [0, 32], sizes = [8, 32], strides = [1, 1]} : vector<8x128xf32> to vector<8x32xf32>
    %23 = vector.extract_strided_slice %20 {offsets = [0, 64], sizes = [8, 32], strides = [1, 1]} : vector<8x128xf32> to vector<8x32xf32>
    %24 = vector.extract_strided_slice %20 {offsets = [0, 96], sizes = [8, 32], strides = [1, 1]} : vector<8x128xf32> to vector<8x32xf32>
    %c0_i32_17 = arith.constant 0 : i32
    %c8_i32 = arith.constant 8 : i32
    %25 = arith.muli %c0_i32_17, %c8_i32 : i32
    %26 = tpu.assume_multiple %25, 8 : i32
    %27 = arith.index_cast %26 : i32 to index
    %c0_18 = arith.constant 0 : index
    %28 = vector.load %arg13[%27, %c0_18] : memref<8x128xf32, #tpu.memory_space<vmem>>, vector<8x128xf32>
    %cst_19 = arith.constant dense<0.000000e+00> : vector<8x128xf32>
    %29 = tpu.matmul %21, %12, %cst_19 {dimension_numbers = #tpu.dot_dimension_numbers<[1], [0], [0], [1], [0, 0, 1, 1], [], []>} : vector<8x32xf32>, vector<32x128xf32>, vector<8x128xf32> -> vector<8x128xf32>
    %30 = arith.addf %28, %29 : vector<8x128xf32>
    %31 = arith.negf %30 : vector<8x128xf32>
    %32 = math.exp %31 : vector<8x128xf32>
    %cst_20 = arith.constant 1.000000e+00 : f32
    %33 = vector.broadcast %cst_20 : f32 to vector<8x128xf32>
    %34 = arith.addf %33, %32 : vector<8x128xf32>
    %35 = arith.divf %33, %34 : vector<8x128xf32>
    %36 = vector.extract_strided_slice %35 {offsets = [0, 0], sizes = [8, 32], strides = [1, 1]} : vector<8x128xf32> to vector<8x32xf32>
    %37 = vector.extract_strided_slice %35 {offsets = [0, 32], sizes = [8, 32], strides = [1, 1]} : vector<8x128xf32> to vector<8x32xf32>
    %38 = vector.extract_strided_slice %35 {offsets = [0, 96], sizes = [8, 32], strides = [1, 1]} : vector<8x128xf32> to vector<8x32xf32>
    %39 = vector.extract_strided_slice %30 {offsets = [0, 64], sizes = [8, 32], strides = [1, 1]} : vector<8x128xf32> to vector<8x32xf32>
    %40 = math.tanh %39 : vector<8x32xf32>
    %41 = arith.mulf %37, %23 : vector<8x32xf32>
    %42 = arith.mulf %36, %40 : vector<8x32xf32>
    %43 = arith.addf %41, %42 : vector<8x32xf32>
    %44 = math.tanh %43 : vector<8x32xf32>
    %45 = arith.mulf %38, %44 : vector<8x32xf32>
    %cst_21 = arith.constant dense<0.000000e+00> : vector<8x128xf32>
    %46 = tpu.matmul %22, %14, %cst_21 {dimension_numbers = #tpu.dot_dimension_numbers<[1], [0], [0], [1], [0, 0, 1, 1], [], []>} : vector<8x32xf32>, vector<32x128xf32>, vector<8x128xf32> -> vector<8x128xf32>
    %cst_22 = arith.constant dense<0.000000e+00> : vector<8x128xf32>
    %47 = tpu.matmul %45, %13, %cst_22 {dimension_numbers = #tpu.dot_dimension_numbers<[1], [0], [0], [1], [0, 0, 1, 1], [], []>} : vector<8x32xf32>, vector<32x128xf32>, vector<8x128xf32> -> vector<8x128xf32>
    %48 = arith.addf %46, %47 : vector<8x128xf32>
    %49 = arith.addf %48, %17 : vector<8x128xf32>
    %50 = arith.negf %49 : vector<8x128xf32>
    %51 = math.exp %50 : vector<8x128xf32>
    %cst_23 = arith.constant 1.000000e+00 : f32
    %52 = vector.broadcast %cst_23 : f32 to vector<8x128xf32>
    %53 = arith.addf %52, %51 : vector<8x128xf32>
    %54 = arith.divf %52, %53 : vector<8x128xf32>
    %55 = vector.extract_strided_slice %54 {offsets = [0, 0], sizes = [8, 32], strides = [1, 1]} : vector<8x128xf32> to vector<8x32xf32>
    %56 = vector.extract_strided_slice %54 {offsets = [0, 32], sizes = [8, 32], strides = [1, 1]} : vector<8x128xf32> to vector<8x32xf32>
    %57 = vector.extract_strided_slice %54 {offsets = [0, 96], sizes = [8, 32], strides = [1, 1]} : vector<8x128xf32> to vector<8x32xf32>
    %58 = vector.extract_strided_slice %49 {offsets = [0, 64], sizes = [8, 32], strides = [1, 1]} : vector<8x128xf32> to vector<8x32xf32>
    %59 = math.tanh %58 : vector<8x32xf32>
    %60 = arith.mulf %56, %24 : vector<8x32xf32>
    %61 = arith.mulf %55, %59 : vector<8x32xf32>
    %62 = arith.addf %60, %61 : vector<8x32xf32>
    %63 = math.tanh %62 : vector<8x32xf32>
    %64 = arith.mulf %57, %63 : vector<8x32xf32>
    %65 = arith.index_cast %26 : i32 to index
    %c0_24 = arith.constant 0 : index
    %66 = vector.load %arg14[%65, %c0_24] : memref<8x32xf32, #tpu.memory_space<vmem>>, vector<8x32xf32>
    tpu.vector_store %arg14[%65, %c0_24], %64 {strides = array<i32>} : memref<8x32xf32, #tpu.memory_space<vmem>>, vector<8x32xf32>,
    %67 = arith.addi %19, %c0_i32_17 : i32
    %68 = arith.cmpi slt, %67, %18 : i32
    %69 = arith.select %68, %45, %21 : vector<8x32xf32>
    %70 = arith.select %68, %64, %22 : vector<8x32xf32>
    %71 = arith.select %68, %43, %23 : vector<8x32xf32>
    %72 = arith.select %68, %62, %24 : vector<8x32xf32>
    %c1_i32_25 = arith.constant 1 : i32
    %c0_26 = arith.constant 0 : index
    %c0_27 = arith.constant 0 : index
    %73 = vector.load %arg14[%c0_26, %c0_27] : memref<8x32xf32, #tpu.memory_space<vmem>>, vector<8x32xf32>
    %c0_28 = arith.constant 0 : index
    %c0_29 = arith.constant 0 : index
    %74 = vector.load %arg9[%c0_28, %c0_29] : memref<32x128xf32, #tpu.memory_space<vmem>>, vector<32x128xf32>
    %cst_30 = arith.constant dense<0.000000e+00> : vector<8x128xf32>
    %75 = tpu.matmul %73, %74, %cst_30 {dimension_numbers = #tpu.dot_dimension_numbers<[1], [0], [0], [1], [0, 0, 1, 1], [], []>} : vector<8x32xf32>, vector<32x128xf32>, vector<8x128xf32> -> vector<8x128xf32>
    %c0_31 = arith.constant 0 : index
    %c0_32 = arith.constant 0 : index
    %76 = vector.load %arg10[%c0_31, %c0_32] : memref<1x128xf32, #tpu.memory_space<vmem>>, vector<1x128xf32>
    %77 = vector.broadcast %76 : vector<1x128xf32> to vector<8x128xf32>
    %78 = arith.addf %75, %77 : vector<8x128xf32>
    %79 = vector.shape_cast %78 : vector<8x128xf32> to vector<1x8x128xf32>
    %c0_33 = arith.constant 0 : index
    %c0_34 = arith.constant 0 : index
    %c0_35 = arith.constant 0 : index
    %80 = vector.load %arg11[%c0_33, %c0_34, %c0_35] : memref<1x8x128xf32, #tpu.memory_space<vmem>>, vector<1x8x128xf32>
    tpu.vector_store %arg11[%c0_33, %c0_34, %c0_35], %79 {strides = array<i32>} : memref<1x8x128xf32, #tpu.memory_space<vmem>>, vector<1x8x128xf32>,
    %81 = tpu.concatenate %69, %70, %71, %72 in 1 : vector<8x32xf32>, vector<8x32xf32>, vector<8x32xf32>, vector<8x32xf32> -> vector<8x128xf32>
    %c0_36 = arith.constant 0 : index
    %c0_37 = arith.constant 0 : index
    %82 = vector.load %arg12[%c0_36, %c0_37] : memref<8x128xf32, #tpu.memory_space<vmem>>, vector<8x128xf32>
    tpu.vector_store %arg12[%c0_36, %c0_37], %81 {strides = array<i32>} : memref<8x128xf32, #tpu.memory_space<vmem>>, vector<8x128xf32>,
    return
  }
  func.func @transform_0(%arg0: i32) -> i32 {
    %c0_i32 = arith.constant 0 : i32
    %c0_i32_0 = arith.constant 0 : i32
    return %c0_i32 : i32
  }
  func.func @transform_1(%arg0: i32) -> (i32, i32) {
    %c0_i32 = arith.constant 0 : i32
    %c0_i32_0 = arith.constant 0 : i32
    return %arg0, %c0_i32 : i32, i32
  }
  func.func @transform_2(%arg0: i32) -> (i32, i32) {
    %c0_i32 = arith.constant 0 : i32
    %c0_i32_0 = arith.constant 0 : i32
    %c0_i32_1 = arith.constant 0 : i32
    return %c0_i32, %c0_i32_0 : i32, i32
  }
  func.func @transform_3(%arg0: i32) -> (i32, i32) {
    %c0_i32 = arith.constant 0 : i32
    %c0_i32_0 = arith.constant 0 : i32
    %c0_i32_1 = arith.constant 0 : i32
    return %c0_i32, %c0_i32_0 : i32, i32
  }
  func.func @transform_4(%arg0: i32) -> (i32, i32) {
    %c0_i32 = arith.constant 0 : i32
    %c0_i32_0 = arith.constant 0 : i32
    %c0_i32_1 = arith.constant 0 : i32
    return %c0_i32, %c0_i32_0 : i32, i32
  }
  func.func @transform_5(%arg0: i32) -> (i32, i32) {
    %c0_i32 = arith.constant 0 : i32
    %c0_i32_0 = arith.constant 0 : i32
    %c0_i32_1 = arith.constant 0 : i32
    return %c0_i32, %c0_i32_0 : i32, i32
  }
  func.func @transform_6(%arg0: i32) -> (i32, i32) {
    %c0_i32 = arith.constant 0 : i32
    %c0_i32_0 = arith.constant 0 : i32
    %c0_i32_1 = arith.constant 0 : i32
    return %c0_i32, %c0_i32_0 : i32, i32
  }
  func.func @transform_7(%arg0: i32) -> (i32, i32) {
    %c0_i32 = arith.constant 0 : i32
    %c0_i32_0 = arith.constant 0 : i32
    %c0_i32_1 = arith.constant 0 : i32
    return %c0_i32, %c0_i32_0 : i32, i32
  }
  func.func @transform_8(%arg0: i32) -> (i32, i32) {
    %c0_i32 = arith.constant 0 : i32
    %c0_i32_0 = arith.constant 0 : i32
    %c0_i32_1 = arith.constant 0 : i32
    return %c0_i32, %c0_i32_0 : i32, i32
  }
  func.func @transform_9(%arg0: i32) -> (i32, i32) {
    %c0_i32 = arith.constant 0 : i32
    %c0_i32_0 = arith.constant 0 : i32
    %c0_i32_1 = arith.constant 0 : i32
    return %c0_i32, %c0_i32_0 : i32, i32
  }
  func.func @transform_10(%arg0: i32) -> (i32, i32, i32) {
    %c0_i32 = arith.constant 0 : i32
    %c0_i32_0 = arith.constant 0 : i32
    %c0_i32_1 = arith.constant 0 : i32
    return %arg0, %c0_i32, %c0_i32_0 : i32, i32, i32
  }
  func.func @transform_11(%arg0: i32) -> (i32, i32) {
    %c0_i32 = arith.constant 0 : i32
    %c0_i32_0 = arith.constant 0 : i32
    %c0_i32_1 = arith.constant 0 : i32
    return %c0_i32, %c0_i32_0 : i32, i32
  }
}

</mosaic_0001>

<llo_original>
// kernel: tpu_custom_call.1
$region0: #{tpu_custom_call.1}
  #allocation0 [shape = 'u32[]', space=smem, size = 0x4, offset = 0x4, fixed_abs, tag = 'smem constant byte address 0x4 - core index']
  #allocation1 [shape = 'u32[144,128]{1,0:T(1,128)}', space=vmem, size = 0x12000, scoped, tag = 'internal scratch']
  #allocation2 [shape = 'f32[8,128]{1,0:T(8,128)}', space=vmem, size = 0x1000, scoped, tag = 'scratch operand']
  #allocation3 [shape = 'f32[8,32]{1,0:T(8,128)}', space=vmem, size = 0x1000, scoped, tag = 'scratch operand']
  #allocation4 [shape = 's32[1]{0:T(128)S(6)}', space=smem, size = 0x200, scoped, tag = 'scoped memory for tpu_custom_call.1']
  %s0 = inlined_call_operand.<no memory space> [shape: s32[1], index: 0, kind: input, shape index: {}]
  %s1 = inlined_call_operand.vmem [shape: s32[8,1], index: 1, kind: input, shape index: {}]
  %s2 = inlined_call_operand.hbm [shape: f32[128,128], index: 2, kind: input, shape index: {}]
  %s3 = inlined_call_operand.hbm [shape: f32[8,128], index: 3, kind: input, shape index: {}, may-alias: {3,11}]
  %s4 = inlined_call_operand.vmem [shape: f32[32,128], index: 4, kind: input, shape index: {}]
  %s5 = inlined_call_operand.hbm [shape: f32[32,128], index: 5, kind: input, shape index: {}]
  %s6 = inlined_call_operand.hbm [shape: f32[32,128], index: 6, kind: input, shape index: {}]
  %s7 = inlined_call_operand.vmem [shape: f32[1,128], index: 7, kind: input, shape index: {}]
  %s8 = inlined_call_operand.hbm [shape: f32[32,128], index: 8, kind: input, shape index: {}]
  %s9 = inlined_call_operand.vmem [shape: f32[1,128], index: 9, kind: input, shape index: {}]
  %s10 = inlined_call_operand.hbm [shape: f32[1,8,128], index: 10, kind: output, shape index: {0}]
  %s11 = inlined_call_operand.hbm [shape: f32[8,128], index: 11, kind: output, shape index: {1}, may-alias: {3,11}]
  %12 = xla_tuple %s10, %s11
  %s13 = sld [smem:[#allocation0]]
  $region82: #{tpu_custom_call.1} parent=0
    _
  %s15 = ssub.s32 1, %s13
  %s16 = scalar_select 0, %s15, %s13
  %17 = sst [smem:[#allocation4]] %s0
  $region1: #{tpu_custom_call.1} parent=0
    #allocation5 [shape = 'u8[65536]{0}', space=vmem, size = 0x10000, scoped, tag = 'input window, operand 2, single buffered']
    #allocation6 [shape = 's32[1]{0}', space=sflag, size = 0x4, scoped, tag = 'scoped memory for tpu_custom_call.1']
    #allocation7 [shape = 's32[1]{0}', space=sflag, size = 0x4, scoped, tag = 'scoped memory for tpu_custom_call.1']
    #allocation8 [shape = 'u8[4096]{0}', space=vmem, size = 0x1000, scoped, tag = 'input window, operand 3, single buffered']
    #allocation9 [shape = 's32[1]{0}', space=sflag, size = 0x4, scoped, tag = 'scoped memory for tpu_custom_call.1']
    #allocation10 [shape = 'u8[16384]{0}', space=vmem, size = 0x4000, scoped, tag = 'input window, operand 5, single buffered']
    #allocation11 [shape = 'u8[16384]{0}', space=vmem, size = 0x4000, scoped, tag = 'input window, operand 6, single buffered']
    #allocation12 [shape = 's32[1]{0}', space=sflag, size = 0x4, scoped, tag = 'scoped memory for tpu_custom_call.1']
    #allocation13 [shape = 'u8[16384]{0}', space=vmem, size = 0x4000, scoped, tag = 'input window, operand 8, single buffered']
    #allocation14 [shape = 'u8[4096]{0}', space=vmem, size = 0x1000, scoped, tag = 'output window, operand 0, single buffered']
    #allocation15 [shape = 'u8[4096]{0}', space=vmem, size = 0x1000, scoped, tag = 'output window, operand 1, single buffered']
    #allocation16 [shape = 's32[1]{0}', space=sflag, size = 0x4, scoped, tag = 'scoped memory for tpu_custom_call.1']
    %18 = vsyncpa [#allocation6], 0
    %19 = vsyncpa [#allocation9], 0
    %20 = vsyncpa [#allocation12], 0
    %21 = vsyncpa [#allocation7], 0
    %22 = vsyncpa [#allocation16], 0
    // Predicated region
    $region2: #{tpu_custom_call.1} parent=1 // pred_check
      _
    $region3: #{tpu_custom_call.1} parent=1 // pred_check_branch
      %24 = sbr.rel (0) target = $region5
    $region4: #{tpu_custom_call.1} parent=1 // pred_region
      _
    $region5: #{tpu_custom_call.1} parent=1 // pred_fallthru
      _
    // Predicated region
    $region6: #{tpu_custom_call.1} parent=1 // pred_check
      _
    $region7: #{tpu_custom_call.1} parent=1 // pred_check_branch
      %26 = sbr.rel (0) target = $region9
    $region8: #{tpu_custom_call.1} parent=1 // pred_region
      _
    $region9: #{tpu_custom_call.1} parent=1 // pred_fallthru
      _
    // Predicated region
    $region10: #{tpu_custom_call.1} parent=1 // pred_check
      _
    $region11: #{tpu_custom_call.1} parent=1 // pred_check_branch
      %28 = sbr.rel (0) target = $region13
    $region12: #{tpu_custom_call.1} parent=1 // pred_region
      %s30 = ssub.s32 2048, 2048
      %31 = vsyncadd [#allocation6], %s30
      %s32 = sshll.u32 [#allocation5], 4
      %s33 = int_to_ptr.vmem [resolvable:$true] %s32
      %38 = dma.hbm_to_vmem [thread:$0]  %s2, 2048, %s33, [#allocation6], 128, 128, 8
    $region13: #{tpu_custom_call.1} parent=1 // pred_fallthru
      _
    // Predicated region
    $region14: #{tpu_custom_call.1} parent=1 // pred_check
      _
    $region15: #{tpu_custom_call.1} parent=1 // pred_check_branch
      %40 = sbr.rel (0) target = $region17
    $region16: #{tpu_custom_call.1} parent=1 // pred_region
      %s42 = ssub.s32 128, 128
      %43 = vsyncadd [#allocation9], %s42
      %s45 = sshll.u32 [#allocation8], 4
      %s46 = int_to_ptr.vmem [resolvable:$true] %s45
      %48 = dma.hbm_to_vmem [thread:$0]  %s3, 128, %s46, [#allocation9]
    $region17: #{tpu_custom_call.1} parent=1 // pred_fallthru
      _
    // Predicated region
    $region18: #{tpu_custom_call.1} parent=1 // pred_check
      _
    $region19: #{tpu_custom_call.1} parent=1 // pred_check_branch
      %50 = sbr.rel (0) target = $region21
    $region20: #{tpu_custom_call.1} parent=1 // pred_region
      _
    $region21: #{tpu_custom_call.1} parent=1 // pred_fallthru
      _
    // Predicated region
    $region22: #{tpu_custom_call.1} parent=1 // pred_check
      _
    $region23: #{tpu_custom_call.1} parent=1 // pred_check_branch
      %52 = sbr.rel (0) target = $region25
    $region24: #{tpu_custom_call.1} parent=1 // pred_region
      %s54 = ssub.s32 512, 512
      %55 = vsyncadd [#allocation9], %s54
      %s56 = sshll.u32 [#allocation10], 4
      %s57 = int_to_ptr.vmem [resolvable:$true] %s56
      %62 = dma.hbm_to_vmem [thread:$0]  %s5, 512, %s57, [#allocation9], 128, 128, 8
    $region25: #{tpu_custom_call.1} parent=1 // pred_fallthru
      _
    // Predicated region
    $region26: #{tpu_custom_call.1} parent=1 // pred_check
      _
    $region27: #{tpu_custom_call.1} parent=1 // pred_check_branch
      %64 = sbr.rel (0) target = $region29
    $region28: #{tpu_custom_call.1} parent=1 // pred_region
      %s66 = ssub.s32 512, 512
      %67 = vsyncadd [#allocation12], %s66
      %s68 = sshll.u32 [#allocation11], 4
      %s69 = int_to_ptr.vmem [resolvable:$true] %s68
      %74 = dma.hbm_to_vmem [thread:$0]  %s6, 512, %s69, [#allocation12], 128, 128, 8
    $region29: #{tpu_custom_call.1} parent=1 // pred_fallthru
      _
    // Predicated region
    $region30: #{tpu_custom_call.1} parent=1 // pred_check
      _
    $region31: #{tpu_custom_call.1} parent=1 // pred_check_branch
      %76 = sbr.rel (0) target = $region33
    $region32: #{tpu_custom_call.1} parent=1 // pred_region
      _
    $region33: #{tpu_custom_call.1} parent=1 // pred_fallthru
      _
    // Predicated region
    $region34: #{tpu_custom_call.1} parent=1 // pred_check
      _
    $region35: #{tpu_custom_call.1} parent=1 // pred_check_branch
      %78 = sbr.rel (0) target = $region37
    $region36: #{tpu_custom_call.1} parent=1 // pred_region
      %s80 = ssub.s32 512, 512
      %81 = vsyncadd [#allocation12], %s80
      %s82 = sshll.u32 [#allocation13], 4
      %s83 = int_to_ptr.vmem [resolvable:$true] %s82
      %88 = dma.hbm_to_vmem [thread:$0]  %s8, 512, %s83, [#allocation12], 128, 128, 8
    $region37: #{tpu_custom_call.1} parent=1 // pred_fallthru
      _
    // Predicated region
    $region38: #{tpu_custom_call.1} parent=1 // pred_check
      _
    $region39: #{tpu_custom_call.1} parent=1 // pred_check_branch
      %90 = sbr.rel (0) target = $region41
    $region40: #{tpu_custom_call.1} parent=1 // pred_region
      _
    $region41: #{tpu_custom_call.1} parent=1 // pred_fallthru
      _
    // Predicated region
    $region42: #{tpu_custom_call.1} parent=1 // pred_check
      _
    $region43: #{tpu_custom_call.1} parent=1 // pred_check_branch
      %92 = sbr.rel (0) target = $region45
    $region44: #{tpu_custom_call.1} parent=1 // pred_region
      %93 = dma.done [#allocation6], 2048
    $region45: #{tpu_custom_call.1} parent=1 // pred_fallthru
      _
    // Predicated region
    $region46: #{tpu_custom_call.1} parent=1 // pred_check
      _
    $region47: #{tpu_custom_call.1} parent=1 // pred_check_branch
      %95 = sbr.rel (0) target = $region49
    $region48: #{tpu_custom_call.1} parent=1 // pred_region
      %96 = dma.done [#allocation9], 128
    $region49: #{tpu_custom_call.1} parent=1 // pred_fallthru
      _
    // Predicated region
    $region50: #{tpu_custom_call.1} parent=1 // pred_check
      _
    $region51: #{tpu_custom_call.1} parent=1 // pred_check_branch
      %98 = sbr.rel (0) target = $region53
    $region52: #{tpu_custom_call.1} parent=1 // pred_region
      %99 = dma.done [#allocation9], 512
    $region53: #{tpu_custom_call.1} parent=1 // pred_fallthru
      _
    // Predicated region
    $region54: #{tpu_custom_call.1} parent=1 // pred_check
      _
    $region55: #{tpu_custom_call.1} parent=1 // pred_check_branch
      %101 = sbr.rel (0) target = $region57
    $region56: #{tpu_custom_call.1} parent=1 // pred_region
      %102 = dma.done [#allocation12], 512
    $region57: #{tpu_custom_call.1} parent=1 // pred_fallthru
      _
    // Predicated region
    $region58: #{tpu_custom_call.1} parent=1 // pred_check
      _
    $region59: #{tpu_custom_call.1} parent=1 // pred_check_branch
      %104 = sbr.rel (0) target = $region61
    $region60: #{tpu_custom_call.1} parent=1 // pred_region
      %105 = dma.done [#allocation12], 512
    $region61: #{tpu_custom_call.1} parent=1 // pred_fallthru
      _
    %p106 = scmp.eq.s32.totalorder 0, 0
    // Predicated region
    $region62: #{tpu_custom_call.1} parent=1 // pred_check
      %p107 = pneg %p106
    $region63: #{tpu_custom_call.1} parent=1 // pred_check_branch
      %109 = sbr.rel (%p107) target = $region65
    $region64: #{tpu_custom_call.1} parent=1 // pred_region
      %v110 = vld [vmem:[#allocation8] sm:$0xff]
      %111 = vst [vmem:[#allocation15] sm:$0xff] %v110
    $region65: #{tpu_custom_call.1} parent=1 // pred_fallthru
      _
    %v112 = vld [vmem:[%s1] sm:$0xff]
    %v113 = vlaneseq
    %v114 = vand.u32 %v113, 127
    %115 = vset.pattern.permute.xlu0 0
    %116 = vperm.xlu0 %115, %v112
    %v117 = vpop.permute.xlu0 %116
    %vm118 = vcmp.eq.s32.totalorder %v114, %v117
    %v119 = vsel %vm118, 1, 0
    %v120 = vcvt.s32.f32 %v119
    %v121 = vld [vmem:[#allocation5] sm:$0xff]
    %v122 = vld [vmem:[#allocation5 + $0x8] sm:$0xff]
    %v123 = vld [vmem:[#allocation5 + $0x10] sm:$0xff]
    %v124 = vld [vmem:[#allocation5 + $0x18] sm:$0xff]
    %v125 = vld [vmem:[#allocation5 + $0x20] sm:$0xff]
    %v126 = vld [vmem:[#allocation5 + $0x28] sm:$0xff]
    %v127 = vld [vmem:[#allocation5 + $0x30] sm:$0xff]
    %v128 = vld [vmem:[#allocation5 + $0x38] sm:$0xff]
    %v129 = vld [vmem:[#allocation5 + $0x40] sm:$0xff]
    %v130 = vld [vmem:[#allocation5 + $0x48] sm:$0xff]
    %v131 = vld [vmem:[#allocation5 + $0x50] sm:$0xff]
    %v132 = vld [vmem:[#allocation5 + $0x58] sm:$0xff]
    %v133 = vld [vmem:[#allocation5 + $0x60] sm:$0xff]
    %v134 = vld [vmem:[#allocation5 + $0x68] sm:$0xff]
    %v135 = vld [vmem:[#allocation5 + $0x70] sm:$0xff]
    %v136 = vld [vmem:[#allocation5 + $0x78] sm:$0xff]
    %137 = vmatprep.subr.mxu0 0.0
    %138 = vmatpush1.msra.mxu0 %v121
    %139 = vmatprep.subr.mxu0 0.0
    %140 = vmatpush1.msra.mxu0 %v122
    %141 = vmatprep.subr.mxu0 0.0
    %142 = vmatpush1.msra.mxu0 %v123
    %143 = vmatprep.subr.mxu0 0.0
    %144 = vmatpush1.msra.mxu0 %v124
    %145 = vmatprep.subr.mxu0 0.0
    %146 = vmatpush1.msra.mxu0 %v125
    %147 = vmatprep.subr.mxu0 0.0
    %148 = vmatpush1.msra.mxu0 %v126
    %149 = vmatprep.subr.mxu0 0.0
    %150 = vmatpush1.msra.mxu0 %v127
    %151 = vmatprep.subr.mxu0 0.0
    %152 = vmatpush1.msra.mxu0 %v128
    %153 = vmatprep.subr.mxu0 0.0
    %154 = vmatpush1.msra.mxu0 %v129
    %155 = vmatprep.subr.mxu0 0.0
    %156 = vmatpush1.msra.mxu0 %v130
    %157 = vmatprep.subr.mxu0 0.0
    %158 = vmatpush1.msra.mxu0 %v131
    %159 = vmatprep.subr.mxu0 0.0
    %160 = vmatpush1.msra.mxu0 %v132
    %161 = vmatprep.subr.mxu0 0.0
    %162 = vmatpush1.msra.mxu0 %v133
    %163 = vmatprep.subr.mxu0 0.0
    %164 = vmatpush1.msra.mxu0 %v134
    %165 = vmatprep.subr.mxu0 0.0
    %166 = vmatpush1.msra.mxu0 %v135
    %167 = vmatprep.subr.mxu0 0.0
    %168 = vmatpush1.msra.mxu0 %v136
    %169 = vmatprep.subr.mxu0 0.0
    %170 = vmatpush1.msra.mxu0 0.0
    %171 = vmatprep.subr.mxu0 0.0
    %172 = vmatpush1.msra.mxu0 0.0
    %173 = vmatprep.subr.mxu0 0.0
    %174 = vmatpush1.msra.mxu0 0.0
    %175 = vmatprep.subr.mxu0 0.0
    %176 = vmatpush1.msra.mxu0 0.0
    %177 = vmatprep.subr.mxu0 0.0
    %178 = vmatpush1.msra.mxu0 0.0
    %179 = vmatprep.subr.mxu0 0.0
    %180 = vmatpush1.msra.mxu0 0.0
    %181 = vmatprep.subr.mxu0 0.0
    %182 = vmatpush1.msra.mxu0 0.0
    %183 = vmatprep.subr.mxu0 0.0
    %184 = vmatpush1.msra.mxu0 0.0
    %185 = vmatprep.subr.mxu0 0.0
    %186 = vmatpush1.msra.mxu0 0.0
    %187 = vmatprep.subr.mxu0 0.0
    %188 = vmatpush1.msra.mxu0 0.0
    %189 = vmatprep.subr.mxu0 0.0
    %190 = vmatpush1.msra.mxu0 0.0
    %191 = vmatprep.subr.mxu0 0.0
    %192 = vmatpush1.msra.mxu0 0.0
    %193 = vmatprep.subr.mxu0 0.0
    %194 = vmatpush1.msra.mxu0 0.0
    %195 = vmatprep.subr.mxu0 0.0
    %196 = vmatpush1.msra.mxu0 0.0
    %197 = vmatprep.subr.mxu0 0.0
    %198 = vmatpush1.msra.mxu0 0.0
    %199 = vmatprep.subr.mxu0 0.0
    %200 = vmatpush1.msra.mxu0 0.0
    %201 = vmatprep.mubr.f32.mxu0 0.0
    %202 = vmatmul.mubr.f32.gmra.mrb[0].mxu0 %v120
    %v203 = vpop.f32.mrb[0].mxu0
    %v204 = vadd.f32 0.0, %v203
    %v205 = vpop.f32.mrb[0].mxu0
    %206 = vdwg.mxu0
    %207 = vst [vmem:[#allocation2] sm:$0xff] %v204
    %v208 = vld [vmem:[%s4] sm:$0xff]
    %v209 = vld [vmem:[%s4 + $0x8] sm:$0xff]
    %v210 = vld [vmem:[%s4 + $0x10] sm:$0xff]
    %v211 = vld [vmem:[%s4 + $0x18] sm:$0xff]
    %v212 = vld [vmem:[#allocation10] sm:$0xff]
    %v213 = vld [vmem:[#allocation10 + $0x8] sm:$0xff]
    %v214 = vld [vmem:[#allocation10 + $0x10] sm:$0xff]
    %v215 = vld [vmem:[#allocation10 + $0x18] sm:$0xff]
    %v216 = vld [vmem:[#allocation11] sm:$0xff]
    %v217 = vld [vmem:[#allocation11 + $0x8] sm:$0xff]
    %v218 = vld [vmem:[#allocation11 + $0x10] sm:$0xff]
    %v219 = vld [vmem:[#allocation11 + $0x18] sm:$0xff]
    %v220 = vld [vmem:[%s7] sm:$0x1]
    %v222 = vlaneseq
    %v223 = vshrl.u32 %v222, 7
    %v224 = vsub.s32 0, %v223
    %v225 = vrot.slane %v220, %v224
    %s227 = sld [smem:[#allocation4]]
    %v228 = vld [vmem:[#allocation15] sm:$0xff]
    %v229 = vld [vmem:[#allocation2] sm:$0xff]
    %vm230 = vcmask 261120
    %v232 = vsel %vm230, %v228, 0
    %234 = vmatprep.subr.mxu0 0.0
    %235 = vmatpush1.msra.mxu0 %v208
    %236 = vmatprep.subr.mxu0 0.0
    %237 = vmatpush1.msra.mxu0 %v209
    %238 = vmatprep.subr.mxu0 0.0
    %239 = vmatpush1.msra.mxu0 %v210
    %240 = vmatprep.subr.mxu0 0.0
    %241 = vmatpush1.msra.mxu0 %v211
    %242 = vmatprep.subr.mxu0 0.0
    %243 = vmatpush1.msra.mxu0 0.0
    %244 = vmatprep.subr.mxu0 0.0
    %245 = vmatpush1.msra.mxu0 0.0
    %246 = vmatprep.subr.mxu0 0.0
    %247 = vmatpush1.msra.mxu0 0.0
    %248 = vmatprep.subr.mxu0 0.0
    %249 = vmatpush1.msra.mxu0 0.0
    %250 = vmatprep.subr.mxu0 0.0
    %251 = vmatpush1.msra.mxu0 0.0
    %252 = vmatprep.subr.mxu0 0.0
    %253 = vmatpush1.msra.mxu0 0.0
    %254 = vmatprep.subr.mxu0 0.0
    %255 = vmatpush1.msra.mxu0 0.0
    %256 = vmatprep.subr.mxu0 0.0
    %257 = vmatpush1.msra.mxu0 0.0
    %258 = vmatprep.subr.mxu0 0.0
    %259 = vmatpush1.msra.mxu0 0.0
    %260 = vmatprep.subr.mxu0 0.0
    %261 = vmatpush1.msra.mxu0 0.0
    %262 = vmatprep.subr.mxu0 0.0
    %263 = vmatpush1.msra.mxu0 0.0
    %264 = vmatprep.subr.mxu0 0.0
    %265 = vmatpush1.msra.mxu0 0.0
    %266 = vmatprep.subr.mxu0 0.0
    %267 = vmatpush1.msra.mxu0 0.0
    %268 = vmatprep.subr.mxu0 0.0
    %269 = vmatpush1.msra.mxu0 0.0
    %270 = vmatprep.subr.mxu0 0.0
    %271 = vmatpush1.msra.mxu0 0.0
    %272 = vmatprep.subr.mxu0 0.0
    %273 = vmatpush1.msra.mxu0 0.0
    %274 = vmatprep.subr.mxu0 0.0
    %275 = vmatpush1.msra.mxu0 0.0
    %276 = vmatprep.subr.mxu0 0.0
    %277 = vmatpush1.msra.mxu0 0.0
    %278 = vmatprep.subr.mxu0 0.0
    %279 = vmatpush1.msra.mxu0 0.0
    %280 = vmatprep.subr.mxu0 0.0
    %281 = vmatpush1.msra.mxu0 0.0
    %282 = vmatprep.subr.mxu0 0.0
    %283 = vmatpush1.msra.mxu0 0.0
    %284 = vmatprep.subr.mxu0 0.0
    %285 = vmatpush1.msra.mxu0 0.0
    %286 = vmatprep.subr.mxu0 0.0
    %287 = vmatpush1.msra.mxu0 0.0
    %288 = vmatprep.subr.mxu0 0.0
    %289 = vmatpush1.msra.mxu0 0.0
    %290 = vmatprep.subr.mxu0 0.0
    %291 = vmatpush1.msra.mxu0 0.0
    %292 = vmatprep.subr.mxu0 0.0
    %293 = vmatpush1.msra.mxu0 0.0
    %294 = vmatprep.subr.mxu0 0.0
    %295 = vmatpush1.msra.mxu0 0.0
    %296 = vmatprep.subr.mxu0 0.0
    %297 = vmatpush1.msra.mxu0 0.0
    %298 = vmatprep.mubr.f32.mxu0 0.0
    %299 = vmatmul.mubr.f32.gmra.mrb[0].mxu0 %v232
    %v300 = vpop.f32.mrb[0].mxu0
    %v301 = vadd.f32 0.0, %v300
    %v302 = vpop.f32.mrb[0].mxu0
    %303 = vdwg.mxu0
    %v304 = vadd.f32 %v229, %v301
    %v305 = vxor.u32 %v304, 2147483648
    %v306 = vmul.f32 %v305, 1.442695
    %v307 = vpow.pop %v306
    %v308 = vadd.f32 %v307, 1.0
    %v309 = vrcp.pop %v308
    %v310 = vmul.f32 1.0, %v309
    %v311 = vtanh.pop %v304
    %312 = vrot.lane.b32.xlu0 %v228, 96
    %v313 = vpop.permute.xlu0 %312
    %v315 = vmul.f32 %v310, %v313
    %317 = vrot.lane.b32.xlu0 %v311, 64
    %v318 = vpop.permute.xlu0 %317
    %v320 = vmul.f32 %v310, %v318
    %322 = vrot.lane.b32.xlu0 %v320, 32
    %v323 = vpop.permute.xlu0 %322
    %v325 = vadd.f32 %v315, %v323
    %v326 = vtanh.pop %v325
    %328 = vrot.lane.b32.xlu0 %v326, 64
    %v329 = vpop.permute.xlu0 %328
    %v331 = vmul.f32 %v310, %v329
    %333 = vrot.lane.b32.xlu0 %v331, 32
    %v334 = vpop.permute.xlu0 %333
    %v335 = vsel %vm230, %v334, 0
    %337 = vmatprep.subr.mxu0 0.0
    %338 = vmatpush1.msra.mxu0 %v212
    %339 = vmatprep.subr.mxu0 0.0
    %340 = vmatpush1.msra.mxu0 %v213
    %341 = vmatprep.subr.mxu0 0.0
    %342 = vmatpush1.msra.mxu0 %v214
    %343 = vmatprep.subr.mxu0 0.0
    %344 = vmatpush1.msra.mxu0 %v215
    %345 = vmatprep.subr.mxu0 0.0
    %346 = vmatpush1.msra.mxu0 0.0
    %347 = vmatprep.subr.mxu0 0.0
    %348 = vmatpush1.msra.mxu0 0.0
    %349 = vmatprep.subr.mxu0 0.0
    %350 = vmatpush1.msra.mxu0 0.0
    %351 = vmatprep.subr.mxu0 0.0
    %352 = vmatpush1.msra.mxu0 0.0
    %353 = vmatprep.subr.mxu0 0.0
    %354 = vmatpush1.msra.mxu0 0.0
    %355 = vmatprep.subr.mxu0 0.0
    %356 = vmatpush1.msra.mxu0 0.0
    %357 = vmatprep.subr.mxu0 0.0
    %358 = vmatpush1.msra.mxu0 0.0
    %359 = vmatprep.subr.mxu0 0.0
    %360 = vmatpush1.msra.mxu0 0.0
    %361 = vmatprep.subr.mxu0 0.0
    %362 = vmatpush1.msra.mxu0 0.0
    %363 = vmatprep.subr.mxu0 0.0
    %364 = vmatpush1.msra.mxu0 0.0
    %365 = vmatprep.subr.mxu0 0.0
    %366 = vmatpush1.msra.mxu0 0.0
    %367 = vmatprep.subr.mxu0 0.0
    %368 = vmatpush1.msra.mxu0 0.0
    %369 = vmatprep.subr.mxu0 0.0
    %370 = vmatpush1.msra.mxu0 0.0
    %371 = vmatprep.subr.mxu0 0.0
    %372 = vmatpush1.msra.mxu0 0.0
    %373 = vmatprep.subr.mxu0 0.0
    %374 = vmatpush1.msra.mxu0 0.0
    %375 = vmatprep.subr.mxu0 0.0
    %376 = vmatpush1.msra.mxu0 0.0
    %377 = vmatprep.subr.mxu0 0.0
    %378 = vmatpush1.msra.mxu0 0.0
    %379 = vmatprep.subr.mxu0 0.0
    %380 = vmatpush1.msra.mxu0 0.0
    %381 = vmatprep.subr.mxu0 0.0
    %382 = vmatpush1.msra.mxu0 0.0
    %383 = vmatprep.subr.mxu0 0.0
    %384 = vmatpush1.msra.mxu0 0.0
    %385 = vmatprep.subr.mxu0 0.0
    %386 = vmatpush1.msra.mxu0 0.0
    %387 = vmatprep.subr.mxu0 0.0
    %388 = vmatpush1.msra.mxu0 0.0
    %389 = vmatprep.subr.mxu0 0.0
    %390 = vmatpush1.msra.mxu0 0.0
    %391 = vmatprep.subr.mxu0 0.0
    %392 = vmatpush1.msra.mxu0 0.0
    %393 = vmatprep.subr.mxu0 0.0
    %394 = vmatpush1.msra.mxu0 0.0
    %395 = vmatprep.subr.mxu0 0.0
    %396 = vmatpush1.msra.mxu0 0.0
    %397 = vmatprep.subr.mxu0 0.0
    %398 = vmatpush1.msra.mxu0 0.0
    %399 = vmatprep.subr.mxu0 0.0
    %400 = vmatpush1.msra.mxu0 0.0
    %401 = vmatprep.mubr.f32.mxu0 0.0
    %402 = vmatmul.mubr.f32.gmra.mrb[0].mxu0 %v335
    %v403 = vpop.f32.mrb[0].mxu0
    %v404 = vadd.f32 0.0, %v403
    %v405 = vpop.f32.mrb[0].mxu0
    %406 = vdwg.mxu0
    %v407 = vsel %vm230, %v313, 0
    %409 = vmatprep.subr.mxu0 0.0
    %410 = vmatpush1.msra.mxu0 %v216
    %411 = vmatprep.subr.mxu0 0.0
    %412 = vmatpush1.msra.mxu0 %v217
    %413 = vmatprep.subr.mxu0 0.0
    %414 = vmatpush1.msra.mxu0 %v218
    %415 = vmatprep.subr.mxu0 0.0
    %416 = vmatpush1.msra.mxu0 %v219
    %417 = vmatprep.subr.mxu0 0.0
    %418 = vmatpush1.msra.mxu0 0.0
    %419 = vmatprep.subr.mxu0 0.0
    %420 = vmatpush1.msra.mxu0 0.0
    %421 = vmatprep.subr.mxu0 0.0
    %422 = vmatpush1.msra.mxu0 0.0
    %423 = vmatprep.subr.mxu0 0.0
    %424 = vmatpush1.msra.mxu0 0.0
    %425 = vmatprep.subr.mxu0 0.0
    %426 = vmatpush1.msra.mxu0 0.0
    %427 = vmatprep.subr.mxu0 0.0
    %428 = vmatpush1.msra.mxu0 0.0
    %429 = vmatprep.subr.mxu0 0.0
    %430 = vmatpush1.msra.mxu0 0.0
    %431 = vmatprep.subr.mxu0 0.0
    %432 = vmatpush1.msra.mxu0 0.0
    %433 = vmatprep.subr.mxu0 0.0
    %434 = vmatpush1.msra.mxu0 0.0
    %435 = vmatprep.subr.mxu0 0.0
    %436 = vmatpush1.msra.mxu0 0.0
    %437 = vmatprep.subr.mxu0 0.0
    %438 = vmatpush1.msra.mxu0 0.0
    %439 = vmatprep.subr.mxu0 0.0
    %440 = vmatpush1.msra.mxu0 0.0
    %441 = vmatprep.subr.mxu0 0.0
    %442 = vmatpush1.msra.mxu0 0.0
    %443 = vmatprep.subr.mxu0 0.0
    %444 = vmatpush1.msra.mxu0 0.0
    %445 = vmatprep.subr.mxu0 0.0
    %446 = vmatpush1.msra.mxu0 0.0
    %447 = vmatprep.subr.mxu0 0.0
    %448 = vmatpush1.msra.mxu0 0.0
    %449 = vmatprep.subr.mxu0 0.0
    %450 = vmatpush1.msra.mxu0 0.0
    %451 = vmatprep.subr.mxu0 0.0
    %452 = vmatpush1.msra.mxu0 0.0
    %453 = vmatprep.subr.mxu0 0.0
    %454 = vmatpush1.msra.mxu0 0.0
    %455 = vmatprep.subr.mxu0 0.0
    %456 = vmatpush1.msra.mxu0 0.0
    %457 = vmatprep.subr.mxu0 0.0
    %458 = vmatpush1.msra.mxu0 0.0
    %459 = vmatprep.subr.mxu0 0.0
    %460 = vmatpush1.msra.mxu0 0.0
    %461 = vmatprep.subr.mxu0 0.0
    %462 = vmatpush1.msra.mxu0 0.0
    %463 = vmatprep.subr.mxu0 0.0
    %464 = vmatpush1.msra.mxu0 0.0
    %465 = vmatprep.subr.mxu0 0.0
    %466 = vmatpush1.msra.mxu0 0.0
    %467 = vmatprep.subr.mxu0 0.0
    %468 = vmatpush1.msra.mxu0 0.0
    %469 = vmatprep.subr.mxu0 0.0
    %470 = vmatpush1.msra.mxu0 0.0
    %471 = vmatprep.subr.mxu0 0.0
    %472 = vmatpush1.msra.mxu0 0.0
    %473 = vmatprep.mubr.f32.mxu0 0.0
    %474 = vmatmul.mubr.f32.gmra.mrb[0].mxu0 %v407
    %v475 = vpop.f32.mrb[0].mxu0
    %v476 = vadd.f32 %v404, %v475
    %v477 = vpop.f32.mrb[0].mxu0
    %478 = vdwg.mxu0
    %v479 = vadd.f32 %v476, %v225
    %v480 = vxor.u32 %v479, 2147483648
    %v481 = vmul.f32 %v480, 1.442695
    %v482 = vpow.pop %v481
    %v483 = vadd.f32 %v482, 1.0
    %v484 = vrcp.pop %v483
    %v485 = vmul.f32 1.0, %v484
    %v486 = vtanh.pop %v479
    %487 = vrot.lane.b32.xlu0 %v228, 64
    %v488 = vpop.permute.xlu0 %487
    %v490 = vmul.f32 %v485, %v488
    %492 = vrot.lane.b32.xlu0 %v486, 64
    %v493 = vpop.permute.xlu0 %492
    %v495 = vmul.f32 %v485, %v493
    %497 = vrot.lane.b32.xlu0 %v495, 32
    %v498 = vpop.permute.xlu0 %497
    %v500 = vadd.f32 %v490, %v498
    %v501 = vtanh.pop %v500
    %503 = vrot.lane.b32.xlu0 %v501, 64
    %v504 = vpop.permute.xlu0 %503
    %v506 = vmul.f32 %v485, %v504
    %508 = vrot.lane.b32.xlu0 %v506, 32
    %v509 = vpop.permute.xlu0 %508
    %511 = vst.msk [vmem:[#allocation3] sm:$0xff] %vm230, %v509
    %p512 = scmp.lt.s32.totalorder 0, %s227
    %s513 = scalar_select %p512, 1, 0
    %v514 = vstv %s513
    %vm515 = vcmp.eq.s32.totalorder %v514, 1
    %v516 = vsel %vm515, %v331, %v313
    %v517 = vsel %vm515, %v506, %v488
    %v518 = vsel %vm515, %v325, %v313
    %v519 = vsel %vm515, %v500, %v488
    %v520 = vld [vmem:[#allocation3] sm:$0xff]
    %v521 = vld [vmem:[#allocation13] sm:$0xff]
    %v522 = vld [vmem:[#allocation13 + $0x8] sm:$0xff]
    %v523 = vld [vmem:[#allocation13 + $0x10] sm:$0xff]
    %v524 = vld [vmem:[#allocation13 + $0x18] sm:$0xff]
    %v525 = vld [vmem:[%s9] sm:$0x1]
    %v527 = vlaneseq
    %v528 = vshrl.u32 %v527, 7
    %v529 = vsub.s32 0, %v528
    %v530 = vrot.slane %v525, %v529
    %v533 = vsel %vm230, %v520, 0
    %535 = vmatprep.subr.mxu0 0.0
    %536 = vmatpush1.msra.mxu0 %v521
    %537 = vmatprep.subr.mxu0 0.0
    %538 = vmatpush1.msra.mxu0 %v522
    %539 = vmatprep.subr.mxu0 0.0
    %540 = vmatpush1.msra.mxu0 %v523
    %541 = vmatprep.subr.mxu0 0.0
    %542 = vmatpush1.msra.mxu0 %v524
    %543 = vmatprep.subr.mxu0 0.0
    %544 = vmatpush1.msra.mxu0 0.0
    %545 = vmatprep.subr.mxu0 0.0
    %546 = vmatpush1.msra.mxu0 0.0
    %547 = vmatprep.subr.mxu0 0.0
    %548 = vmatpush1.msra.mxu0 0.0
    %549 = vmatprep.subr.mxu0 0.0
    %550 = vmatpush1.msra.mxu0 0.0
    %551 = vmatprep.subr.mxu0 0.0
    %552 = vmatpush1.msra.mxu0 0.0
    %553 = vmatprep.subr.mxu0 0.0
    %554 = vmatpush1.msra.mxu0 0.0
    %555 = vmatprep.subr.mxu0 0.0
    %556 = vmatpush1.msra.mxu0 0.0
    %557 = vmatprep.subr.mxu0 0.0
    %558 = vmatpush1.msra.mxu0 0.0
    %559 = vmatprep.subr.mxu0 0.0
    %560 = vmatpush1.msra.mxu0 0.0
    %561 = vmatprep.subr.mxu0 0.0
    %562 = vmatpush1.msra.mxu0 0.0
    %563 = vmatprep.subr.mxu0 0.0
    %564 = vmatpush1.msra.mxu0 0.0
    %565 = vmatprep.subr.mxu0 0.0
    %566 = vmatpush1.msra.mxu0 0.0
    %567 = vmatprep.subr.mxu0 0.0
    %568 = vmatpush1.msra.mxu0 0.0
    %569 = vmatprep.subr.mxu0 0.0
    %570 = vmatpush1.msra.mxu0 0.0
    %571 = vmatprep.subr.mxu0 0.0
    %572 = vmatpush1.msra.mxu0 0.0
    %573 = vmatprep.subr.mxu0 0.0
    %574 = vmatpush1.msra.mxu0 0.0
    %575 = vmatprep.subr.mxu0 0.0
    %576 = vmatpush1.msra.mxu0 0.0
    %577 = vmatprep.subr.mxu0 0.0
    %578 = vmatpush1.msra.mxu0 0.0
    %579 = vmatprep.subr.mxu0 0.0
    %580 = vmatpush1.msra.mxu0 0.0
    %581 = vmatprep.subr.mxu0 0.0
    %582 = vmatpush1.msra.mxu0 0.0
    %583 = vmatprep.subr.mxu0 0.0
    %584 = vmatpush1.msra.mxu0 0.0
    %585 = vmatprep.subr.mxu0 0.0
    %586 = vmatpush1.msra.mxu0 0.0
    %587 = vmatprep.subr.mxu0 0.0
    %588 = vmatpush1.msra.mxu0 0.0
    %589 = vmatprep.subr.mxu0 0.0
    %590 = vmatpush1.msra.mxu0 0.0
    %591 = vmatprep.subr.mxu0 0.0
    %592 = vmatpush1.msra.mxu0 0.0
    %593 = vmatprep.subr.mxu0 0.0
    %594 = vmatpush1.msra.mxu0 0.0
    %595 = vmatprep.subr.mxu0 0.0
    %596 = vmatpush1.msra.mxu0 0.0
    %597 = vmatprep.subr.mxu0 0.0
    %598 = vmatpush1.msra.mxu0 0.0
    %599 = vmatprep.mubr.f32.mxu0 0.0
    %600 = vmatmul.mubr.f32.gmra.mrb[0].mxu0 %v533
    %v601 = vpop.f32.mrb[0].mxu0
    %v602 = vadd.f32 %v530, %v601
    %v603 = vpop.f32.mrb[0].mxu0
    %604 = vdwg.mxu0
    %605 = vst [vmem:[#allocation14] sm:$0xff] %v602
    %607 = vrot.lane.b32.xlu0 %v516, 32
    %v608 = vpop.permute.xlu0 %607
    %611 = vrot.lane.b32.xlu0 %v517, 64
    %v612 = vpop.permute.xlu0 %611
    %615 = vrot.lane.b32.xlu0 %v518, 32
    %v616 = vpop.permute.xlu0 %615
    %619 = vrot.lane.b32.xlu0 %v519, 64
    %v620 = vpop.permute.xlu0 %619
    %v622 = vsel %vm230, %v608, %v612
    %vm623 = vcmask 523264
    %v624 = vsel %vm623, %v622, %v616
    %vm625 = vcmask 785408
    %v626 = vsel %vm625, %v624, %v620
    %627 = vst [vmem:[#allocation15] sm:$0xff] %v626
    // Predicated region
    $region66: #{tpu_custom_call.1} parent=1 // pred_check
      _
    $region67: #{tpu_custom_call.1} parent=1 // pred_check_branch
      %629 = sbr.rel (0) target = $region69
    $region68: #{tpu_custom_call.1} parent=1 // pred_region
      %s631 = ssub.s32 128, 128
      %632 = vsyncadd [#allocation7], %s631
      %s634 = sshll.u32 [#allocation14], 4
      %s635 = int_to_ptr.vmem [resolvable:$true] %s634
      %637 = dma.vmem_to_hbm [thread:$0]  %s635, 128, %s10, [#allocation7]
    $region69: #{tpu_custom_call.1} parent=1 // pred_fallthru
      _
    // Predicated region
    $region70: #{tpu_custom_call.1} parent=1 // pred_check
      _
    $region71: #{tpu_custom_call.1} parent=1 // pred_check_branch
      %639 = sbr.rel (0) target = $region73
    $region72: #{tpu_custom_call.1} parent=1 // pred_region
      %s641 = ssub.s32 128, 128
      %642 = vsyncadd [#allocation16], %s641
      %s644 = sshll.u32 [#allocation15], 4
      %s645 = int_to_ptr.vmem [resolvable:$true] %s644
      %647 = dma.vmem_to_hbm [thread:$0]  %s645, 128, %s11, [#allocation16]
    $region73: #{tpu_custom_call.1} parent=1 // pred_fallthru
      _
    // Predicated region
    $region74: #{tpu_custom_call.1} parent=1 // pred_check
      _
    $region75: #{tpu_custom_call.1} parent=1 // pred_check_branch
      %649 = sbr.rel (0) target = $region77
    $region76: #{tpu_custom_call.1} parent=1 // pred_region
      %650 = dma.done [#allocation7], 128
    $region77: #{tpu_custom_call.1} parent=1 // pred_fallthru
      _
    // Predicated region
    $region78: #{tpu_custom_call.1} parent=1 // pred_check
      _
    $region79: #{tpu_custom_call.1} parent=1 // pred_check_branch
      %652 = sbr.rel (0) target = $region81
    $region80: #{tpu_custom_call.1} parent=1 // pred_region
      %653 = dma.done [#allocation16], 128
    $region81: #{tpu_custom_call.1} parent=1 // pred_fallthru
      _
    %654 = vsyncpa [#allocation6], 1
    %655 = vsyncpa [#allocation9], 1
    %656 = vsyncpa [#allocation12], 1
    %657 = vsyncpa [#allocation7], 1
    %658 = vsyncpa [#allocation16], 1

</llo_original>
